<compile_context>
chip_gen: v5e
topology: v5e:2x2
jax: 0.10.0
libtpu: 0.0.40
codegen_flags: <defaults>
</compile_context>

<pallas_src>
import functools

import jax
import jax.numpy as jnp
from jax.experimental import pallas as pl
from jax.experimental.pallas import tpu as pltpu  # noqa: F401  (TPU lowering)

_NEG_BIG = -1e30  # finite "masked" logit; avoids -inf -> NaN on fully-masked rows


def _gat_layer_kernel(x_ref, adj_ref,
                      w1_ref, albd1_ref, arbd1_ref, b1_ref,
                      w2_ref, albd2_ref, arbd2_ref, b2m_ref,
                      out_ref,
                      *, num_heads, hidden_dim, output_dim, negative_slope):
    H = num_heads
    x = x_ref[...]                 # (N, F_in)

    # Additive softmax mask: 0.0 on edges, -1e30 elsewhere.  Computed once and
    # reused by both convolutions / every head (the graph does not change).
    mask_bias = jnp.where(adj_ref[...] > 0.0, 0.0, _NEG_BIG)        # (N_dst, N_src)

    def gat_heads(z, al_bd, ar_bd, d):
        """Masked edge-softmax aggregation for all heads.

        z:     (N, H*d)  all-head projected features (single wide MXU matmul)
        al_bd: (H*d, H)  block-diagonal a_l  ->  el = z @ al_bd  (MXU, no lane reduce)
        ar_bd: (H*d, H)  block-diagonal a_r  ->  er = z @ ar_bd
        Returns a list of H per-head aggregated outputs of shape (N, d).
        """
        el = jnp.dot(z, al_bd, preferred_element_type=jnp.float32)   # (N, H)  el[src, h]
        er = jnp.dot(z, ar_bd, preferred_element_type=jnp.float32)   # (N, H)  er[dst, h]
        el_t = jnp.transpose(el)                                     # (H, N)  one transpose, not H
        outs = []
        for h in range(H):
            # scores[dst, src] = LeakyReLU(el[src] + er[dst])
            s = er[:, h:h + 1] + el_t[h:h + 1, :]                    # (N, N)
            s = jnp.where(s > 0, s, negative_slope * s)              # LeakyReLU
            s = s + mask_bias                                        # masked -> ~ -1e30
            m = jnp.max(s, axis=-1, keepdims=True)
            p = jnp.exp(s - m)                                       # masked entries underflow to 0
            denom = jnp.sum(p, axis=-1, keepdims=True)
            alpha = p * pl.reciprocal(denom, approx=True)            # EUP divide
            zh = z[:, h * d:(h + 1) * d]                             # (N, d)
            outs.append(jnp.dot(alpha, zh, preferred_element_type=jnp.float32))
        return outs

    # ---- conv1 (+ bias) -> flatten heads -> ReLU -------------------------
    z1 = jnp.dot(x, w1_ref[...], preferred_element_type=jnp.float32)        # (N, H*hidden)
    h1 = jnp.concatenate(
        gat_heads(z1, albd1_ref[...], arbd1_ref[...], hidden_dim), axis=-1)  # (N, H*hidden)
    h1 = jnp.maximum(h1 + b1_ref[...], 0.0)

    # ---- conv2 (+ bias) -> mean over heads --------------------------------
    z2 = jnp.dot(h1, w2_ref[...], preferred_element_type=jnp.float32)       # (N, H*out)
    outs2 = gat_heads(z2, albd2_ref[...], arbd2_ref[...], output_dim)
    acc = outs2[0]
    for h in range(1, H):
        acc = acc + outs2[h]
    out_ref[...] = acc * (1.0 / H) + b2m_ref[...]                           # (N, out)


def _block_diag_cols(a):
    """(H, D) -> (H*D, H); column h holds a[h] in rows [h*D, (h+1)*D)."""
    H, D = a.shape
    eye = jnp.eye(H, dtype=a.dtype)
    return (a[:, :, None] * eye[:, None, :]).reshape(H * D, H)


def gat_layer_forward(adj, feat, params, *, num_heads, hidden_dim, output_dim,
                      negative_slope=0.2):
    """GATLayer.forward: conv1 -> flatten heads -> ReLU -> conv2 -> mean over heads.

    adj:  (N, N) dense mask, adj[dst, src] = 1.0 iff edge src->dst (self-loops included)
    feat: (N, input_dim)
    Returns (N, output_dim).
    """
    N, _ = feat.shape
    H = num_heads

    albd1 = _block_diag_cols(params["al1"])                 # (H*hidden, H)
    arbd1 = _block_diag_cols(params["ar1"])
    albd2 = _block_diag_cols(params["al2"])                 # (H*out, H)
    arbd2 = _block_diag_cols(params["ar2"])
    b1 = params["b1"].reshape(1, H * hidden_dim)            # head-major flatten (matches .flatten(-2))
    b2m = jnp.mean(params["b2"], axis=0, keepdims=True)     # mean over heads commutes with +bias

    kernel = functools.partial(
        _gat_layer_kernel,
        num_heads=H, hidden_dim=hidden_dim, output_dim=output_dim,
        negative_slope=negative_slope,
    )

    # Entire problem (features, adjacency, all weights, intermediates) is a few KB:
    # single grid-less pallas_call with whole-array blocks resident in VMEM.
    # TODO(synk): for large graphs, tile the destination-node axis with a grid and
    # keep the conv1 activation resident in a VMEM scratch.
    return pl.pallas_call(
        kernel,
        out_shape=jax.ShapeDtypeStruct((N, output_dim), jnp.float32),
    )(feat, adj, params["w1"], albd1, arbd1, b1,
      params["w2"], albd2, arbd2, b2m)


def _gat_layer_reference(adj, feat, params, *, num_heads, hidden_dim, output_dim,
                         negative_slope=0.2):
    """Pure-JAX reference (mirrors the dense-DGL semantics)."""
    H = num_heads
    mask = adj > 0.0

    def conv(x, w, al, ar, b, d):
        n = x.shape[0]
        z = (x @ w).reshape(n, H, d)                        # (N, H, d)
        el = jnp.einsum("nhd,hd->nh", z, al)                # (src, h)
        er = jnp.einsum("nhd,hd->nh", z, ar)                # (dst, h)
        s = er[:, None, :] + el[None, :, :]                 # (dst, src, h)
        s = jnp.where(s > 0, s, negative_slope * s)
        s = jnp.where(mask[:, :, None], s, -jnp.inf)
        alpha = jax.nn.softmax(s, axis=1)                   # softmax over src
        return jnp.einsum("dsh,shk->dhk", alpha, z) + b[None]

    h1 = conv(feat, params["w1"], params["al1"], params["ar1"], params["b1"], hidden_dim)
    h1 = jax.nn.relu(h1.reshape(feat.shape[0], H * hidden_dim))
    h2 = conv(h1, params["w2"], params["al2"], params["ar2"], params["b2"], output_dim)
    return h2.mean(axis=1)


if __name__ == "__main__":
    key = jax.random.PRNGKey(0)
    N = 16
    input_dim, hidden_dim, output_dim, num_heads = 8, 16, 8, 4

    keys = jax.random.split(key, 8)

    # node features
    feat = jax.random.normal(keys[0], (N, input_dim), jnp.float32)

    # random directed graph, then dgl.add_self_loop equivalent (dense mask)
    adj = (jax.random.uniform(keys[1], (N, N)) < 0.3).astype(jnp.float32)
    adj = adj * (1.0 - jnp.eye(N, dtype=jnp.float32)) + jnp.eye(N, dtype=jnp.float32)

    def init(k, shape, scale=0.1):
        return scale * jax.random.normal(k, shape, jnp.float32)

    params = {
        # GATConv(input_dim, hidden_dim, num_heads)
        "w1": init(keys[2], (input_dim, num_heads * hidden_dim)),
        "al1": init(keys[3], (num_heads, hidden_dim)),
        "ar1": init(keys[4], (num_heads, hidden_dim)),
        "b1": jnp.zeros((num_heads, hidden_dim), jnp.float32),
        # GATConv(hidden_dim * num_heads, output_dim, num_heads)
        "w2": init(keys[5], (num_heads * hidden_dim, num_heads * output_dim)),
        "al2": init(keys[6], (num_heads, output_dim)),
        "ar2": init(keys[7], (num_heads, output_dim)),
        "b2": jnp.zeros((num_heads, output_dim), jnp.float32),
    }

    out = gat_layer_forward(adj, feat, params,
                            num_heads=num_heads,
                            hidden_dim=hidden_dim,
                            output_dim=output_dim)
    out = jax.block_until_ready(out)

    ref = _gat_layer_reference(adj, feat, params,
                               num_heads=num_heads,
                               hidden_dim=hidden_dim,
                               output_dim=output_dim)

    assert out.shape == (N, output_dim), out.shape
    assert bool(jnp.all(jnp.isfinite(out)))
    assert bool(jnp.allclose(out, ref, rtol=5e-2, atol=5e-3)), \
        float(jnp.max(jnp.abs(out - ref)))
    print("KERNEL_OK")
</pallas_src>

<mosaic_0001>
module attributes {stable_mosaic.version = 11 : i64} {
  func.func @_gat_layer_kernel(%arg0: memref<16x8xf32, #tpu.memory_space<vmem>>, %arg1: memref<16x16xf32, #tpu.memory_space<vmem>>, %arg2: memref<8x64xf32, #tpu.memory_space<vmem>>, %arg3: memref<64x4xf32, #tpu.memory_space<vmem>>, %arg4: memref<64x4xf32, #tpu.memory_space<vmem>>, %arg5: memref<1x64xf32, #tpu.memory_space<vmem>>, %arg6: memref<64x32xf32, #tpu.memory_space<vmem>>, %arg7: memref<32x4xf32, #tpu.memory_space<vmem>>, %arg8: memref<32x4xf32, #tpu.memory_space<vmem>>, %arg9: memref<1x8xf32, #tpu.memory_space<vmem>>, %arg10: memref<16x8xf32, #tpu.memory_space<vmem>>) attributes {dimension_semantics = [], scalar_prefetch = 0 : i64, scratch_operands = 0 : i64, tpu.core_type = #tpu.core_type<tc>} {
    %c0 = arith.constant 0 : index
    %c0_0 = arith.constant 0 : index
    %0 = vector.load %arg0[%c0, %c0_0] : memref<16x8xf32, #tpu.memory_space<vmem>>, vector<16x8xf32>
    %c0_1 = arith.constant 0 : index
    %c0_2 = arith.constant 0 : index
    %1 = vector.load %arg1[%c0_1, %c0_2] : memref<16x16xf32, #tpu.memory_space<vmem>>, vector<16x16xf32>
    %cst = arith.constant 0.000000e+00 : f32
    %2 = vector.broadcast %cst : f32 to vector<16x16xf32>
    %3 = arith.cmpf ogt, %1, %2 : vector<16x16xf32>
    %cst_3 = arith.constant 0.000000e+00 : f32
    %cst_4 = arith.constant -1.000000e+30 : f32
    %4 = vector.broadcast %cst_3 : f32 to vector<16x16xf32>
    %5 = vector.broadcast %cst_4 : f32 to vector<16x16xf32>
    %6 = arith.select %3, %4, %5 : vector<16x16xi1>, vector<16x16xf32>
    %c0_5 = arith.constant 0 : index
    %c0_6 = arith.constant 0 : index
    %7 = vector.load %arg2[%c0_5, %c0_6] : memref<8x64xf32, #tpu.memory_space<vmem>>, vector<8x64xf32>
    %cst_7 = arith.constant dense<0.000000e+00> : vector<16x64xf32>
    %8 = tpu.matmul %0, %7, %cst_7 {dimension_numbers = #tpu.dot_dimension_numbers<[1], [0], [0], [1], [0, 0, 1, 1], [], []>} : vector<16x8xf32>, vector<8x64xf32>, vector<16x64xf32> -> vector<16x64xf32>
    %c0_8 = arith.constant 0 : index
    %c0_9 = arith.constant 0 : index
    %9 = vector.load %arg3[%c0_8, %c0_9] : memref<64x4xf32, #tpu.memory_space<vmem>>, vector<64x4xf32>
    %c0_10 = arith.constant 0 : index
    %c0_11 = arith.constant 0 : index
    %10 = vector.load %arg4[%c0_10, %c0_11] : memref<64x4xf32, #tpu.memory_space<vmem>>, vector<64x4xf32>
    %cst_12 = arith.constant dense<0.000000e+00> : vector<16x4xf32>
    %11 = tpu.matmul %8, %9, %cst_12 {dimension_numbers = #tpu.dot_dimension_numbers<[1], [0], [0], [1], [0, 0, 1, 1], [], []>} : vector<16x64xf32>, vector<64x4xf32>, vector<16x4xf32> -> vector<16x4xf32>
    %cst_13 = arith.constant dense<0.000000e+00> : vector<16x4xf32>
    %12 = tpu.matmul %8, %10, %cst_13 {dimension_numbers = #tpu.dot_dimension_numbers<[1], [0], [0], [1], [0, 0, 1, 1], [], []>} : vector<16x64xf32>, vector<64x4xf32>, vector<16x4xf32> -> vector<16x4xf32>
    %13 = tpu.transpose %11, [1, 0] : vector<16x4xf32> -> vector<4x16xf32>
    %14 = vector.extract_strided_slice %12 {offsets = [0, 0], sizes = [16, 1], strides = [1, 1]} : vector<16x4xf32> to vector<16x1xf32>
    %15 = vector.extract_strided_slice %13 {offsets = [0, 0], sizes = [1, 16], strides = [1, 1]} : vector<4x16xf32> to vector<1x16xf32>
    %16 = vector.broadcast %14 : vector<16x1xf32> to vector<16x16xf32>
    %17 = vector.broadcast %15 : vector<1x16xf32> to vector<16x16xf32>
    %18 = arith.addf %16, %17 : vector<16x16xf32>
    %cst_14 = arith.constant 0.000000e+00 : f32
    %19 = vector.broadcast %cst_14 : f32 to vector<16x16xf32>
    %20 = arith.cmpf ogt, %18, %19 : vector<16x16xf32>
    %cst_15 = arith.constant 2.000000e-01 : f32
    %21 = vector.broadcast %cst_15 : f32 to vector<16x16xf32>
    %22 = arith.mulf %21, %18 : vector<16x16xf32>
    %23 = arith.select %20, %18, %22 : vector<16x16xi1>, vector<16x16xf32>
    %24 = arith.addf %23, %6 : vector<16x16xf32>
    %cst_16 = arith.constant dense<0xFF800000> : vector<16xf32>
    %25 = vector.multi_reduction <maximumf>, %24, %cst_16 [1] : vector<16x16xf32> to vector<16xf32>
    %26 = vector.shape_cast %25 : vector<16xf32> to vector<16x1xf32>
    %27 = vector.broadcast %26 : vector<16x1xf32> to vector<16x16xf32>
    %28 = arith.subf %24, %27 : vector<16x16xf32>
    %29 = math.exp %28 : vector<16x16xf32>
    %cst_17 = arith.constant dense<0.000000e+00> : vector<16xf32>
    %30 = vector.multi_reduction <add>, %29, %cst_17 [1] : vector<16x16xf32> to vector<16xf32>
    %31 = vector.shape_cast %30 : vector<16xf32> to vector<16x1xf32>
    %32 = tpu.reciprocal %31 {approx = true} : vector<16x1xf32> -> vector<16x1xf32>
    %33 = vector.broadcast %32 : vector<16x1xf32> to vector<16x16xf32>
    %34 = arith.mulf %29, %33 : vector<16x16xf32>
    %35 = vector.extract_strided_slice %8 {offsets = [0, 0], sizes = [16, 16], strides = [1, 1]} : vector<16x64xf32> to vector<16x16xf32>
    %cst_18 = arith.constant dense<0.000000e+00> : vector<16x16xf32>
    %36 = tpu.matmul %34, %35, %cst_18 {dimension_numbers = #tpu.dot_dimension_numbers<[1], [0], [0], [1], [0, 0, 1, 1], [], []>} : vector<16x16xf32>, vector<16x16xf32>, vector<16x16xf32> -> vector<16x16xf32>
    %37 = vector.extract_strided_slice %12 {offsets = [0, 1], sizes = [16, 1], strides = [1, 1]} : vector<16x4xf32> to vector<16x1xf32>
    %38 = vector.extract_strided_slice %13 {offsets = [1, 0], sizes = [1, 16], strides = [1, 1]} : vector<4x16xf32> to vector<1x16xf32>
    %39 = vector.broadcast %37 : vector<16x1xf32> to vector<16x16xf32>
    %40 = vector.broadcast %38 : vector<1x16xf32> to vector<16x16xf32>
    %41 = arith.addf %39, %40 : vector<16x16xf32>
    %cst_19 = arith.constant 0.000000e+00 : f32
    %42 = vector.broadcast %cst_19 : f32 to vector<16x16xf32>
    %43 = arith.cmpf ogt, %41, %42 : vector<16x16xf32>
    %cst_20 = arith.constant 2.000000e-01 : f32
    %44 = vector.broadcast %cst_20 : f32 to vector<16x16xf32>
    %45 = arith.mulf %44, %41 : vector<16x16xf32>
    %46 = arith.select %43, %41, %45 : vector<16x16xi1>, vector<16x16xf32>
    %47 = arith.addf %46, %6 : vector<16x16xf32>
    %cst_21 = arith.constant dense<0xFF800000> : vector<16xf32>
    %48 = vector.multi_reduction <maximumf>, %47, %cst_21 [1] : vector<16x16xf32> to vector<16xf32>
    %49 = vector.shape_cast %48 : vector<16xf32> to vector<16x1xf32>
    %50 = vector.broadcast %49 : vector<16x1xf32> to vector<16x16xf32>
    %51 = arith.subf %47, %50 : vector<16x16xf32>
    %52 = math.exp %51 : vector<16x16xf32>
    %cst_22 = arith.constant dense<0.000000e+00> : vector<16xf32>
    %53 = vector.multi_reduction <add>, %52, %cst_22 [1] : vector<16x16xf32> to vector<16xf32>
    %54 = vector.shape_cast %53 : vector<16xf32> to vector<16x1xf32>
    %55 = tpu.reciprocal %54 {approx = true} : vector<16x1xf32> -> vector<16x1xf32>
    %56 = vector.broadcast %55 : vector<16x1xf32> to vector<16x16xf32>
    %57 = arith.mulf %52, %56 : vector<16x16xf32>
    %58 = vector.extract_strided_slice %8 {offsets = [0, 16], sizes = [16, 16], strides = [1, 1]} : vector<16x64xf32> to vector<16x16xf32>
    %cst_23 = arith.constant dense<0.000000e+00> : vector<16x16xf32>
    %59 = tpu.matmul %57, %58, %cst_23 {dimension_numbers = #tpu.dot_dimension_numbers<[1], [0], [0], [1], [0, 0, 1, 1], [], []>} : vector<16x16xf32>, vector<16x16xf32>, vector<16x16xf32> -> vector<16x16xf32>
    %60 = vector.extract_strided_slice %12 {offsets = [0, 2], sizes = [16, 1], strides = [1, 1]} : vector<16x4xf32> to vector<16x1xf32>
    %61 = vector.extract_strided_slice %13 {offsets = [2, 0], sizes = [1, 16], strides = [1, 1]} : vector<4x16xf32> to vector<1x16xf32>
    %62 = vector.broadcast %60 : vector<16x1xf32> to vector<16x16xf32>
    %63 = vector.broadcast %61 : vector<1x16xf32> to vector<16x16xf32>
    %64 = arith.addf %62, %63 : vector<16x16xf32>
    %cst_24 = arith.constant 0.000000e+00 : f32
    %65 = vector.broadcast %cst_24 : f32 to vector<16x16xf32>
    %66 = arith.cmpf ogt, %64, %65 : vector<16x16xf32>
    %cst_25 = arith.constant 2.000000e-01 : f32
    %67 = vector.broadcast %cst_25 : f32 to vector<16x16xf32>
    %68 = arith.mulf %67, %64 : vector<16x16xf32>
    %69 = arith.select %66, %64, %68 : vector<16x16xi1>, vector<16x16xf32>
    %70 = arith.addf %69, %6 : vector<16x16xf32>
    %cst_26 = arith.constant dense<0xFF800000> : vector<16xf32>
    %71 = vector.multi_reduction <maximumf>, %70, %cst_26 [1] : vector<16x16xf32> to vector<16xf32>
    %72 = vector.shape_cast %71 : vector<16xf32> to vector<16x1xf32>
    %73 = vector.broadcast %72 : vector<16x1xf32> to vector<16x16xf32>
    %74 = arith.subf %70, %73 : vector<16x16xf32>
    %75 = math.exp %74 : vector<16x16xf32>
    %cst_27 = arith.constant dense<0.000000e+00> : vector<16xf32>
    %76 = vector.multi_reduction <add>, %75, %cst_27 [1] : vector<16x16xf32> to vector<16xf32>
    %77 = vector.shape_cast %76 : vector<16xf32> to vector<16x1xf32>
    %78 = tpu.reciprocal %77 {approx = true} : vector<16x1xf32> -> vector<16x1xf32>
    %79 = vector.broadcast %78 : vector<16x1xf32> to vector<16x16xf32>
    %80 = arith.mulf %75, %79 : vector<16x16xf32>
    %81 = vector.extract_strided_slice %8 {offsets = [0, 32], sizes = [16, 16], strides = [1, 1]} : vector<16x64xf32> to vector<16x16xf32>
    %cst_28 = arith.constant dense<0.000000e+00> : vector<16x16xf32>
    %82 = tpu.matmul %80, %81, %cst_28 {dimension_numbers = #tpu.dot_dimension_numbers<[1], [0], [0], [1], [0, 0, 1, 1], [], []>} : vector<16x16xf32>, vector<16x16xf32>, vector<16x16xf32> -> vector<16x16xf32>
    %83 = vector.extract_strided_slice %12 {offsets = [0, 3], sizes = [16, 1], strides = [1, 1]} : vector<16x4xf32> to vector<16x1xf32>
    %84 = vector.extract_strided_slice %13 {offsets = [3, 0], sizes = [1, 16], strides = [1, 1]} : vector<4x16xf32> to vector<1x16xf32>
    %85 = vector.broadcast %83 : vector<16x1xf32> to vector<16x16xf32>
    %86 = vector.broadcast %84 : vector<1x16xf32> to vector<16x16xf32>
    %87 = arith.addf %85, %86 : vector<16x16xf32>
    %cst_29 = arith.constant 0.000000e+00 : f32
    %88 = vector.broadcast %cst_29 : f32 to vector<16x16xf32>
    %89 = arith.cmpf ogt, %87, %88 : vector<16x16xf32>
    %cst_30 = arith.constant 2.000000e-01 : f32
    %90 = vector.broadcast %cst_30 : f32 to vector<16x16xf32>
    %91 = arith.mulf %90, %87 : vector<16x16xf32>
    %92 = arith.select %89, %87, %91 : vector<16x16xi1>, vector<16x16xf32>
    %93 = arith.addf %92, %6 : vector<16x16xf32>
    %cst_31 = arith.constant dense<0xFF800000> : vector<16xf32>
    %94 = vector.multi_reduction <maximumf>, %93, %cst_31 [1] : vector<16x16xf32> to vector<16xf32>
    %95 = vector.shape_cast %94 : vector<16xf32> to vector<16x1xf32>
    %96 = vector.broadcast %95 : vector<16x1xf32> to vector<16x16xf32>
    %97 = arith.subf %93, %96 : vector<16x16xf32>
    %98 = math.exp %97 : vector<16x16xf32>
    %cst_32 = arith.constant dense<0.000000e+00> : vector<16xf32>
    %99 = vector.multi_reduction <add>, %98, %cst_32 [1] : vector<16x16xf32> to vector<16xf32>
    %100 = vector.shape_cast %99 : vector<16xf32> to vector<16x1xf32>
    %101 = tpu.reciprocal %100 {approx = true} : vector<16x1xf32> -> vector<16x1xf32>
    %102 = vector.broadcast %101 : vector<16x1xf32> to vector<16x16xf32>
    %103 = arith.mulf %98, %102 : vector<16x16xf32>
    %104 = vector.extract_strided_slice %8 {offsets = [0, 48], sizes = [16, 16], strides = [1, 1]} : vector<16x64xf32> to vector<16x16xf32>
    %cst_33 = arith.constant dense<0.000000e+00> : vector<16x16xf32>
    %105 = tpu.matmul %103, %104, %cst_33 {dimension_numbers = #tpu.dot_dimension_numbers<[1], [0], [0], [1], [0, 0, 1, 1], [], []>} : vector<16x16xf32>, vector<16x16xf32>, vector<16x16xf32> -> vector<16x16xf32>
    %106 = tpu.concatenate %36, %59, %82, %105 in 1 : vector<16x16xf32>, vector<16x16xf32>, vector<16x16xf32>, vector<16x16xf32> -> vector<16x64xf32>
    %c0_34 = arith.constant 0 : index
    %c0_35 = arith.constant 0 : index
    %107 = vector.load %arg5[%c0_34, %c0_35] : memref<1x64xf32, #tpu.memory_space<vmem>>, vector<1x64xf32>
    %108 = vector.broadcast %107 : vector<1x64xf32> to vector<16x64xf32>
    %109 = arith.addf %106, %108 : vector<16x64xf32>
    %cst_36 = arith.constant 0.000000e+00 : f32
    %110 = vector.broadcast %cst_36 : f32 to vector<16x64xf32>
    %111 = arith.maximumf %109, %110 : vector<16x64xf32>
    %c0_37 = arith.constant 0 : index
    %c0_38 = arith.constant 0 : index
    %112 = vector.load %arg6[%c0_37, %c0_38] : memref<64x32xf32, #tpu.memory_space<vmem>>, vector<64x32xf32>
    %cst_39 = arith.constant dense<0.000000e+00> : vector<16x32xf32>
    %113 = tpu.matmul %111, %112, %cst_39 {dimension_numbers = #tpu.dot_dimension_numbers<[1], [0], [0], [1], [0, 0, 1, 1], [], []>} : vector<16x64xf32>, vector<64x32xf32>, vector<16x32xf32> -> vector<16x32xf32>
    %c0_40 = arith.constant 0 : index
    %c0_41 = arith.constant 0 : index
    %114 = vector.load %arg7[%c0_40, %c0_41] : memref<32x4xf32, #tpu.memory_space<vmem>>, vector<32x4xf32>
    %c0_42 = arith.constant 0 : index
    %c0_43 = arith.constant 0 : index
    %115 = vector.load %arg8[%c0_42, %c0_43] : memref<32x4xf32, #tpu.memory_space<vmem>>, vector<32x4xf32>
    %cst_44 = arith.constant dense<0.000000e+00> : vector<16x4xf32>
    %116 = tpu.matmul %113, %114, %cst_44 {dimension_numbers = #tpu.dot_dimension_numbers<[1], [0], [0], [1], [0, 0, 1, 1], [], []>} : vector<16x32xf32>, vector<32x4xf32>, vector<16x4xf32> -> vector<16x4xf32>
    %cst_45 = arith.constant dense<0.000000e+00> : vector<16x4xf32>
    %117 = tpu.matmul %113, %115, %cst_45 {dimension_numbers = #tpu.dot_dimension_numbers<[1], [0], [0], [1], [0, 0, 1, 1], [], []>} : vector<16x32xf32>, vector<32x4xf32>, vector<16x4xf32> -> vector<16x4xf32>
    %118 = tpu.transpose %116, [1, 0] : vector<16x4xf32> -> vector<4x16xf32>
    %119 = vector.extract_strided_slice %117 {offsets = [0, 0], sizes = [16, 1], strides = [1, 1]} : vector<16x4xf32> to vector<16x1xf32>
    %120 = vector.extract_strided_slice %118 {offsets = [0, 0], sizes = [1, 16], strides = [1, 1]} : vector<4x16xf32> to vector<1x16xf32>
    %121 = vector.broadcast %119 : vector<16x1xf32> to vector<16x16xf32>
    %122 = vector.broadcast %120 : vector<1x16xf32> to vector<16x16xf32>
    %123 = arith.addf %121, %122 : vector<16x16xf32>
    %cst_46 = arith.constant 0.000000e+00 : f32
    %124 = vector.broadcast %cst_46 : f32 to vector<16x16xf32>
    %125 = arith.cmpf ogt, %123, %124 : vector<16x16xf32>
    %cst_47 = arith.constant 2.000000e-01 : f32
    %126 = vector.broadcast %cst_47 : f32 to vector<16x16xf32>
    %127 = arith.mulf %126, %123 : vector<16x16xf32>
    %128 = arith.select %125, %123, %127 : vector<16x16xi1>, vector<16x16xf32>
    %129 = arith.addf %128, %6 : vector<16x16xf32>
    %cst_48 = arith.constant dense<0xFF800000> : vector<16xf32>
    %130 = vector.multi_reduction <maximumf>, %129, %cst_48 [1] : vector<16x16xf32> to vector<16xf32>
    %131 = vector.shape_cast %130 : vector<16xf32> to vector<16x1xf32>
    %132 = vector.broadcast %131 : vector<16x1xf32> to vector<16x16xf32>
    %133 = arith.subf %129, %132 : vector<16x16xf32>
    %134 = math.exp %133 : vector<16x16xf32>
    %cst_49 = arith.constant dense<0.000000e+00> : vector<16xf32>
    %135 = vector.multi_reduction <add>, %134, %cst_49 [1] : vector<16x16xf32> to vector<16xf32>
    %136 = vector.shape_cast %135 : vector<16xf32> to vector<16x1xf32>
    %137 = tpu.reciprocal %136 {approx = true} : vector<16x1xf32> -> vector<16x1xf32>
    %138 = vector.broadcast %137 : vector<16x1xf32> to vector<16x16xf32>
    %139 = arith.mulf %134, %138 : vector<16x16xf32>
    %140 = vector.extract_strided_slice %113 {offsets = [0, 0], sizes = [16, 8], strides = [1, 1]} : vector<16x32xf32> to vector<16x8xf32>
    %cst_50 = arith.constant dense<0.000000e+00> : vector<16x8xf32>
    %141 = tpu.matmul %139, %140, %cst_50 {dimension_numbers = #tpu.dot_dimension_numbers<[1], [0], [0], [1], [0, 0, 1, 1], [], []>} : vector<16x16xf32>, vector<16x8xf32>, vector<16x8xf32> -> vector<16x8xf32>
    %142 = vector.extract_strided_slice %117 {offsets = [0, 1], sizes = [16, 1], strides = [1, 1]} : vector<16x4xf32> to vector<16x1xf32>
    %143 = vector.extract_strided_slice %118 {offsets = [1, 0], sizes = [1, 16], strides = [1, 1]} : vector<4x16xf32> to vector<1x16xf32>
    %144 = vector.broadcast %142 : vector<16x1xf32> to vector<16x16xf32>
    %145 = vector.broadcast %143 : vector<1x16xf32> to vector<16x16xf32>
    %146 = arith.addf %144, %145 : vector<16x16xf32>
    %cst_51 = arith.constant 0.000000e+00 : f32
    %147 = vector.broadcast %cst_51 : f32 to vector<16x16xf32>
    %148 = arith.cmpf ogt, %146, %147 : vector<16x16xf32>
    %cst_52 = arith.constant 2.000000e-01 : f32
    %149 = vector.broadcast %cst_52 : f32 to vector<16x16xf32>
    %150 = arith.mulf %149, %146 : vector<16x16xf32>
    %151 = arith.select %148, %146, %150 : vector<16x16xi1>, vector<16x16xf32>
    %152 = arith.addf %151, %6 : vector<16x16xf32>
    %cst_53 = arith.constant dense<0xFF800000> : vector<16xf32>
    %153 = vector.multi_reduction <maximumf>, %152, %cst_53 [1] : vector<16x16xf32> to vector<16xf32>
    %154 = vector.shape_cast %153 : vector<16xf32> to vector<16x1xf32>
    %155 = vector.broadcast %154 : vector<16x1xf32> to vector<16x16xf32>
    %156 = arith.subf %152, %155 : vector<16x16xf32>
    %157 = math.exp %156 : vector<16x16xf32>
    %cst_54 = arith.constant dense<0.000000e+00> : vector<16xf32>
    %158 = vector.multi_reduction <add>, %157, %cst_54 [1] : vector<16x16xf32> to vector<16xf32>
    %159 = vector.shape_cast %158 : vector<16xf32> to vector<16x1xf32>
    %160 = tpu.reciprocal %159 {approx = true} : vector<16x1xf32> -> vector<16x1xf32>
    %161 = vector.broadcast %160 : vector<16x1xf32> to vector<16x16xf32>
    %162 = arith.mulf %157, %161 : vector<16x16xf32>
    %163 = vector.extract_strided_slice %113 {offsets = [0, 8], sizes = [16, 8], strides = [1, 1]} : vector<16x32xf32> to vector<16x8xf32>
    %cst_55 = arith.constant dense<0.000000e+00> : vector<16x8xf32>
    %164 = tpu.matmul %162, %163, %cst_55 {dimension_numbers = #tpu.dot_dimension_numbers<[1], [0], [0], [1], [0, 0, 1, 1], [], []>} : vector<16x16xf32>, vector<16x8xf32>, vector<16x8xf32> -> vector<16x8xf32>
    %165 = vector.extract_strided_slice %117 {offsets = [0, 2], sizes = [16, 1], strides = [1, 1]} : vector<16x4xf32> to vector<16x1xf32>
    %166 = vector.extract_strided_slice %118 {offsets = [2, 0], sizes = [1, 16], strides = [1, 1]} : vector<4x16xf32> to vector<1x16xf32>
    %167 = vector.broadcast %165 : vector<16x1xf32> to vector<16x16xf32>
    %168 = vector.broadcast %166 : vector<1x16xf32> to vector<16x16xf32>
    %169 = arith.addf %167, %168 : vector<16x16xf32>
    %cst_56 = arith.constant 0.000000e+00 : f32
    %170 = vector.broadcast %cst_56 : f32 to vector<16x16xf32>
    %171 = arith.cmpf ogt, %169, %170 : vector<16x16xf32>
    %cst_57 = arith.constant 2.000000e-01 : f32
    %172 = vector.broadcast %cst_57 : f32 to vector<16x16xf32>
    %173 = arith.mulf %172, %169 : vector<16x16xf32>
    %174 = arith.select %171, %169, %173 : vector<16x16xi1>, vector<16x16xf32>
    %175 = arith.addf %174, %6 : vector<16x16xf32>
    %cst_58 = arith.constant dense<0xFF800000> : vector<16xf32>
    %176 = vector.multi_reduction <maximumf>, %175, %cst_58 [1] : vector<16x16xf32> to vector<16xf32>
    %177 = vector.shape_cast %176 : vector<16xf32> to vector<16x1xf32>
    %178 = vector.broadcast %177 : vector<16x1xf32> to vector<16x16xf32>
    %179 = arith.subf %175, %178 : vector<16x16xf32>
    %180 = math.exp %179 : vector<16x16xf32>
    %cst_59 = arith.constant dense<0.000000e+00> : vector<16xf32>
    %181 = vector.multi_reduction <add>, %180, %cst_59 [1] : vector<16x16xf32> to vector<16xf32>
    %182 = vector.shape_cast %181 : vector<16xf32> to vector<16x1xf32>
    %183 = tpu.reciprocal %182 {approx = true} : vector<16x1xf32> -> vector<16x1xf32>
    %184 = vector.broadcast %183 : vector<16x1xf32> to vector<16x16xf32>
    %185 = arith.mulf %180, %184 : vector<16x16xf32>
    %186 = vector.extract_strided_slice %113 {offsets = [0, 16], sizes = [16, 8], strides = [1, 1]} : vector<16x32xf32> to vector<16x8xf32>
    %cst_60 = arith.constant dense<0.000000e+00> : vector<16x8xf32>
    %187 = tpu.matmul %185, %186, %cst_60 {dimension_numbers = #tpu.dot_dimension_numbers<[1], [0], [0], [1], [0, 0, 1, 1], [], []>} : vector<16x16xf32>, vector<16x8xf32>, vector<16x8xf32> -> vector<16x8xf32>
    %188 = vector.extract_strided_slice %117 {offsets = [0, 3], sizes = [16, 1], strides = [1, 1]} : vector<16x4xf32> to vector<16x1xf32>
    %189 = vector.extract_strided_slice %118 {offsets = [3, 0], sizes = [1, 16], strides = [1, 1]} : vector<4x16xf32> to vector<1x16xf32>
    %190 = vector.broadcast %188 : vector<16x1xf32> to vector<16x16xf32>
    %191 = vector.broadcast %189 : vector<1x16xf32> to vector<16x16xf32>
    %192 = arith.addf %190, %191 : vector<16x16xf32>
    %cst_61 = arith.constant 0.000000e+00 : f32
    %193 = vector.broadcast %cst_61 : f32 to vector<16x16xf32>
    %194 = arith.cmpf ogt, %192, %193 : vector<16x16xf32>
    %cst_62 = arith.constant 2.000000e-01 : f32
    %195 = vector.broadcast %cst_62 : f32 to vector<16x16xf32>
    %196 = arith.mulf %195, %192 : vector<16x16xf32>
    %197 = arith.select %194, %192, %196 : vector<16x16xi1>, vector<16x16xf32>
    %198 = arith.addf %197, %6 : vector<16x16xf32>
    %cst_63 = arith.constant dense<0xFF800000> : vector<16xf32>
    %199 = vector.multi_reduction <maximumf>, %198, %cst_63 [1] : vector<16x16xf32> to vector<16xf32>
    %200 = vector.shape_cast %199 : vector<16xf32> to vector<16x1xf32>
    %201 = vector.broadcast %200 : vector<16x1xf32> to vector<16x16xf32>
    %202 = arith.subf %198, %201 : vector<16x16xf32>
    %203 = math.exp %202 : vector<16x16xf32>
    %cst_64 = arith.constant dense<0.000000e+00> : vector<16xf32>
    %204 = vector.multi_reduction <add>, %203, %cst_64 [1] : vector<16x16xf32> to vector<16xf32>
    %205 = vector.shape_cast %204 : vector<16xf32> to vector<16x1xf32>
    %206 = tpu.reciprocal %205 {approx = true} : vector<16x1xf32> -> vector<16x1xf32>
    %207 = vector.broadcast %206 : vector<16x1xf32> to vector<16x16xf32>
    %208 = arith.mulf %203, %207 : vector<16x16xf32>
    %209 = vector.extract_strided_slice %113 {offsets = [0, 24], sizes = [16, 8], strides = [1, 1]} : vector<16x32xf32> to vector<16x8xf32>
    %cst_65 = arith.constant dense<0.000000e+00> : vector<16x8xf32>
    %210 = tpu.matmul %208, %209, %cst_65 {dimension_numbers = #tpu.dot_dimension_numbers<[1], [0], [0], [1], [0, 0, 1, 1], [], []>} : vector<16x16xf32>, vector<16x8xf32>, vector<16x8xf32> -> vector<16x8xf32>
    %211 = arith.addf %141, %164 : vector<16x8xf32>
    %212 = arith.addf %211, %187 : vector<16x8xf32>
    %213 = arith.addf %212, %210 : vector<16x8xf32>
    %cst_66 = arith.constant 2.500000e-01 : f32
    %214 = vector.broadcast %cst_66 : f32 to vector<16x8xf32>
    %215 = arith.mulf %213, %214 : vector<16x8xf32>
    %c0_67 = arith.constant 0 : index
    %c0_68 = arith.constant 0 : index
    %216 = vector.load %arg9[%c0_67, %c0_68] : memref<1x8xf32, #tpu.memory_space<vmem>>, vector<1x8xf32>
    %217 = vector.broadcast %216 : vector<1x8xf32> to vector<16x8xf32>
    %218 = arith.addf %215, %217 : vector<16x8xf32>
    %c0_69 = arith.constant 0 : index
    %c0_70 = arith.constant 0 : index
    %219 = vector.load %arg10[%c0_69, %c0_70] : memref<16x8xf32, #tpu.memory_space<vmem>>, vector<16x8xf32>
    tpu.vector_store %arg10[%c0_69, %c0_70], %218 {strides = array<i32>} : memref<16x8xf32, #tpu.memory_space<vmem>>, vector<16x8xf32>,
    return
  }
}

</mosaic_0001>

<llo_original>
// kernel: tpu_custom_call.1
$region0: #{tpu_custom_call.1}
  #allocation0 [shape = 'u32[]', space=smem, size = 0x4, offset = 0x4, fixed_abs, tag = 'smem constant byte address 0x4 - core index']
  #allocation1 [shape = 'u32[72,128]{1,0:T(1,128)}', space=vmem, size = 0x9000, scoped, tag = 'internal scratch']
  %s0 = inlined_call_operand.vmem [shape: f32[16,8], index: 0, kind: input, shape index: {}]
  %s1 = inlined_call_operand.vmem [shape: f32[16,16], index: 1, kind: input, shape index: {}]
  %s2 = inlined_call_operand.vmem [shape: f32[8,64], index: 2, kind: input, shape index: {}]
  %s3 = inlined_call_operand.vmem [shape: f32[64,4], index: 3, kind: input, shape index: {}]
  %s4 = inlined_call_operand.vmem [shape: f32[64,4], index: 4, kind: input, shape index: {}]
  %s5 = inlined_call_operand.vmem [shape: f32[1,64], index: 5, kind: input, shape index: {}]
  %s6 = inlined_call_operand.vmem [shape: f32[64,32], index: 6, kind: input, shape index: {}]
  %s7 = inlined_call_operand.vmem [shape: f32[32,4], index: 7, kind: input, shape index: {}]
  %s8 = inlined_call_operand.vmem [shape: f32[32,4], index: 8, kind: input, shape index: {}]
  %s9 = inlined_call_operand.vmem [shape: f32[1,8], index: 9, kind: input, shape index: {}]
  %s10 = inlined_call_operand.vmem [shape: f32[16,8], index: 10, kind: output, shape index: {}]
  %s11 = sld [smem:[#allocation0]]
  $region50: #{tpu_custom_call.1} parent=0
    _
  %s13 = ssub.s32 1, %s11
  %s14 = scalar_select 0, %s13, %s11
  // Predicated region
  $region2: #{tpu_custom_call.1} parent=0 // pred_check
    _
  $region3: #{tpu_custom_call.1} parent=0 // pred_check_branch
    %16 = sbr.rel (0) target = $region5
  $region4: #{tpu_custom_call.1} parent=0 // pred_region
    _
  $region5: #{tpu_custom_call.1} parent=0 // pred_fallthru
    _
  // Predicated region
  $region6: #{tpu_custom_call.1} parent=0 // pred_check
    _
  $region7: #{tpu_custom_call.1} parent=0 // pred_check_branch
    %18 = sbr.rel (0) target = $region9
  $region8: #{tpu_custom_call.1} parent=0 // pred_region
    _
  $region9: #{tpu_custom_call.1} parent=0 // pred_fallthru
    _
  // Predicated region
  $region10: #{tpu_custom_call.1} parent=0 // pred_check
    _
  $region11: #{tpu_custom_call.1} parent=0 // pred_check_branch
    %20 = sbr.rel (0) target = $region13
  $region12: #{tpu_custom_call.1} parent=0 // pred_region
    _
  $region13: #{tpu_custom_call.1} parent=0 // pred_fallthru
    _
  // Predicated region
  $region14: #{tpu_custom_call.1} parent=0 // pred_check
    _
  $region15: #{tpu_custom_call.1} parent=0 // pred_check_branch
    %22 = sbr.rel (0) target = $region17
  $region16: #{tpu_custom_call.1} parent=0 // pred_region
    _
  $region17: #{tpu_custom_call.1} parent=0 // pred_fallthru
    _
  // Predicated region
  $region18: #{tpu_custom_call.1} parent=0 // pred_check
    _
  $region19: #{tpu_custom_call.1} parent=0 // pred_check_branch
    %24 = sbr.rel (0) target = $region21
  $region20: #{tpu_custom_call.1} parent=0 // pred_region
    _
  $region21: #{tpu_custom_call.1} parent=0 // pred_fallthru
    _
  // Predicated region
  $region22: #{tpu_custom_call.1} parent=0 // pred_check
    _
  $region23: #{tpu_custom_call.1} parent=0 // pred_check_branch
    %26 = sbr.rel (0) target = $region25
  $region24: #{tpu_custom_call.1} parent=0 // pred_region
    _
  $region25: #{tpu_custom_call.1} parent=0 // pred_fallthru
    _
  // Predicated region
  $region26: #{tpu_custom_call.1} parent=0 // pred_check
    _
  $region27: #{tpu_custom_call.1} parent=0 // pred_check_branch
    %28 = sbr.rel (0) target = $region29
  $region28: #{tpu_custom_call.1} parent=0 // pred_region
    _
  $region29: #{tpu_custom_call.1} parent=0 // pred_fallthru
    _
  // Predicated region
  $region30: #{tpu_custom_call.1} parent=0 // pred_check
    _
  $region31: #{tpu_custom_call.1} parent=0 // pred_check_branch
    %30 = sbr.rel (0) target = $region33
  $region32: #{tpu_custom_call.1} parent=0 // pred_region
    _
  $region33: #{tpu_custom_call.1} parent=0 // pred_fallthru
    _
  // Predicated region
  $region34: #{tpu_custom_call.1} parent=0 // pred_check
    _
  $region35: #{tpu_custom_call.1} parent=0 // pred_check_branch
    %32 = sbr.rel (0) target = $region37
  $region36: #{tpu_custom_call.1} parent=0 // pred_region
    _
  $region37: #{tpu_custom_call.1} parent=0 // pred_fallthru
    _
  // Predicated region
  $region38: #{tpu_custom_call.1} parent=0 // pred_check
    _
  $region39: #{tpu_custom_call.1} parent=0 // pred_check_branch
    %34 = sbr.rel (0) target = $region41
  $region40: #{tpu_custom_call.1} parent=0 // pred_region
    _
  $region41: #{tpu_custom_call.1} parent=0 // pred_fallthru
    _
  %v35 = vld [vmem:[%s0] sm:$0xff]
  %v36 = vld [vmem:[%s0 + $0x8] sm:$0xff]
  %v37 = vld [vmem:[%s1] sm:$0xff]
  %v38 = vld [vmem:[%s1 + $0x8] sm:$0xff]
  %vm39 = vcmp.gt.f32.partialorder %v37, 0.0
  %vm40 = vcmp.gt.f32.partialorder %v38, 0.0
  %v41 = vsel %vm39, 0.0, -1e+30
  %v42 = vsel %vm40, 0.0, -1e+30
  %v43 = vld [vmem:[%s2] sm:$0xff]
  %vm44 = vcmask 64512
  %v46 = vsel %vm44, %v35, 0
  %v49 = vsel %vm44, %v36, 0
  %51 = vmatpush.msra.mxu0 0.0
  %52 = vmatpush.msra.mxu0 0.0
  %53 = vmatpush.msra.mxu0 0.0
  %54 = vmatpush.msra.mxu0 0.0
  %55 = vmatpush.msra.mxu0 0.0
  %56 = vmatpush.msra.mxu0 0.0
  %57 = vmatpush.msra.mxu0 0.0
  %58 = vmatpush.msra.mxu0 0.0
  %59 = vmatpush.msra.mxu0 0.0
  %60 = vmatpush.msra.mxu0 0.0
  %61 = vmatpush.msra.mxu0 0.0
  %62 = vmatpush.msra.mxu0 0.0
  %63 = vmatpush.msra.mxu0 0.0
  %64 = vmatpush.msra.mxu0 0.0
  %65 = vmatpush.msra.mxu0 0.0
  %66 = vmatpush.msra.mxu0 %v43
  %67 = vmatmul.f32.gmra.mxu0 %v46
  %v68 = vpop.f32.mrf.mxu0
  %v69 = vadd.f32 0.0, %v68
  %70 = vmatmul.f32.gmra.mxu0 %v49
  %v71 = vpop.f32.mrf.mxu0
  %v72 = vadd.f32 0.0, %v71
  %73 = vdwg.mxu0
  %v74 = vld [vmem:[%s3] sm:$0xff]
  %v75 = vld [vmem:[%s3 + $0x8] sm:$0xff]
  %v76 = vld [vmem:[%s3 + $0x10] sm:$0xff]
  %v77 = vld [vmem:[%s3 + $0x18] sm:$0xff]
  %v78 = vld [vmem:[%s3 + $0x20] sm:$0xff]
  %v79 = vld [vmem:[%s3 + $0x28] sm:$0xff]
  %v80 = vld [vmem:[%s3 + $0x30] sm:$0xff]
  %v81 = vld [vmem:[%s3 + $0x38] sm:$0xff]
  %v82 = vld [vmem:[%s4] sm:$0xff]
  %v83 = vld [vmem:[%s4 + $0x8] sm:$0xff]
  %v84 = vld [vmem:[%s4 + $0x10] sm:$0xff]
  %v85 = vld [vmem:[%s4 + $0x18] sm:$0xff]
  %v86 = vld [vmem:[%s4 + $0x20] sm:$0xff]
  %v87 = vld [vmem:[%s4 + $0x28] sm:$0xff]
  %v88 = vld [vmem:[%s4 + $0x30] sm:$0xff]
  %v89 = vld [vmem:[%s4 + $0x38] sm:$0xff]
  %vm90 = vcmask 523264
  %v92 = vsel %vm90, %v69, 0
  %v95 = vsel %vm90, %v72, 0
  %97 = vmatpush.msra.mxu0 0.0
  %98 = vmatpush.msra.mxu0 0.0
  %99 = vmatpush.msra.mxu0 0.0
  %100 = vmatpush.msra.mxu0 0.0
  %101 = vmatpush.msra.mxu0 0.0
  %102 = vmatpush.msra.mxu0 0.0
  %103 = vmatpush.msra.mxu0 0.0
  %104 = vmatpush.msra.mxu0 0.0
  %105 = vmatpush.msra.mxu0 %v81
  %106 = vmatpush.msra.mxu0 %v80
  %107 = vmatpush.msra.mxu0 %v79
  %108 = vmatpush.msra.mxu0 %v78
  %109 = vmatpush.msra.mxu0 %v77
  %110 = vmatpush.msra.mxu0 %v76
  %111 = vmatpush.msra.mxu0 %v75
  %112 = vmatpush.msra.mxu0 %v74
  %113 = vmatmul.f32.gmra.mxu0 %v92
  %v114 = vpop.f32.mrf.mxu0
  %v115 = vadd.f32 0.0, %v114
  %116 = vmatmul.f32.gmra.mxu0 %v95
  %v117 = vpop.f32.mrf.mxu0
  %v118 = vadd.f32 0.0, %v117
  %119 = vdwg.mxu0
  %120 = vmatpush.msra.mxu0 0.0
  %121 = vmatpush.msra.mxu0 0.0
  %122 = vmatpush.msra.mxu0 0.0
  %123 = vmatpush.msra.mxu0 0.0
  %124 = vmatpush.msra.mxu0 0.0
  %125 = vmatpush.msra.mxu0 0.0
  %126 = vmatpush.msra.mxu0 0.0
  %127 = vmatpush.msra.mxu0 0.0
  %128 = vmatpush.msra.mxu0 %v89
  %129 = vmatpush.msra.mxu0 %v88
  %130 = vmatpush.msra.mxu0 %v87
  %131 = vmatpush.msra.mxu0 %v86
  %132 = vmatpush.msra.mxu0 %v85
  %133 = vmatpush.msra.mxu0 %v84
  %134 = vmatpush.msra.mxu0 %v83
  %135 = vmatpush.msra.mxu0 %v82
  %136 = vmatmul.f32.gmra.mxu0 %v92
  %v137 = vpop.f32.mrf.mxu0
  %v138 = vadd.f32 0.0, %v137
  %139 = vmatmul.f32.gmra.mxu0 %v95
  %v140 = vpop.f32.mrf.mxu0
  %v141 = vadd.f32 0.0, %v140
  %142 = vdwg.mxu0
  %143 = vxpose.xlu0.b32.start [1/16] %v115, 128
  %144 = vxpose.xlu0.b32.cont [2/16] %v118, 128
  %145 = vxpose.xlu0.b32.cont [3/16] 0.0, 128
  %146 = vxpose.xlu0.b32.cont [4/16] 0.0, 128
  %147 = vxpose.xlu0.b32.cont [5/16] 0.0, 128
  %148 = vxpose.xlu0.b32.cont [6/16] 0.0, 128
  %149 = vxpose.xlu0.b32.cont [7/16] 0.0, 128
  %150 = vxpose.xlu0.b32.cont [8/16] 0.0, 128
  %151 = vxpose.xlu0.b32.cont [9/16] 0.0, 128
  %152 = vxpose.xlu0.b32.cont [10/16] 0.0, 128
  %153 = vxpose.xlu0.b32.cont [11/16] 0.0, 128
  %154 = vxpose.xlu0.b32.cont [12/16] 0.0, 128
  %155 = vxpose.xlu0.b32.cont [13/16] 0.0, 128
  %156 = vxpose.xlu0.b32.cont [14/16] 0.0, 128
  %157 = vxpose.xlu0.b32.cont [15/16] 0.0, 128
  %158 = vxpose.xlu0.b32.end [16/16] 0.0, 128
  %v159 = vpop.trf.xlu0
  %v160 = vpop.trf.xlu0
  %v161 = vpop.trf.xlu0
  %v162 = vpop.trf.xlu0
  %v163 = vpop.trf.xlu0
  %v164 = vpop.trf.xlu0
  %v165 = vpop.trf.xlu0
  %v166 = vpop.trf.xlu0
  %v167 = vpop.trf.xlu0
  %v168 = vpop.trf.xlu0
  %v169 = vpop.trf.xlu0
  %v170 = vpop.trf.xlu0
  %v171 = vpop.trf.xlu0
  %v172 = vpop.trf.xlu0
  %v173 = vpop.trf.xlu0
  %v174 = vpop.trf.xlu0
  %176 = vset.pattern.permute.xlu0 0
  %177 = vperm.xlu0 %176, %v138
  %v178 = vpop.permute.xlu0 %177
  %181 = vset.pattern.permute.xlu0 0
  %182 = vperm.xlu0 %181, %v141
  %v183 = vpop.permute.xlu0 %182
  %v185 = vperm.slane %v159, 0
  %v186 = vadd.f32 %v178, %v185
  %v187 = vadd.f32 %v183, %v185
  %vm188 = vcmp.gt.f32.partialorder %v186, 0.0
  %vm189 = vcmp.gt.f32.partialorder %v187, 0.0
  %v190 = vmul.f32 %v186, 0.2
  %v191 = vmul.f32 %v187, 0.2
  %v192 = vsel %vm188, %v186, %v190
  %v193 = vsel %vm189, %v187, %v191
  %v194 = vadd.f32 %v192, %v41
  %v195 = vadd.f32 %v193, %v42
  %vm196 = vcmask 130048
  %v197 = vsel %vm196, %v194, -inf
  %198 = vmax.xlane.f32.xlu0 %v197
  %v199 = vpop.xlane.xlu0 %198
  %v200 = vsel %vm196, %v195, -inf
  %201 = vmax.xlane.f32.xlu0 %v200
  %v202 = vpop.xlane.xlu0 %201
  %v203 = vsub.f32 %v194, %v199
  %v204 = vsub.f32 %v195, %v202
  %v205 = vmul.f32 %v203, 1.442695
  %v206 = vpow.pop %v205
  %v207 = vmul.f32 %v204, 1.442695
  %v208 = vpow.pop %v207
  %v209 = vsel %vm196, %v206, 0.0
  %210 = vadd.xlane.f32.xlu0 %v209
  %v211 = vpop.xlane.xlu0 %210
  %v212 = vsel %vm196, %v208, 0.0
  %213 = vadd.xlane.f32.xlu0 %v212
  %v214 = vpop.xlane.xlu0 %213
  %v215 = vrcp.pop %v211
  %v216 = vrcp.pop %v214
  %v217 = vmul.f32 %v206, %v215
  %v218 = vmul.f32 %v208, %v216
  %v220 = vsel %vm196, %v217, 0
  %v223 = vsel %vm196, %v218, 0
  %225 = vmatpush.msra.mxu0 0.0
  %226 = vmatpush.msra.mxu0 0.0
  %227 = vmatpush.msra.mxu0 0.0
  %228 = vmatpush.msra.mxu0 0.0
  %229 = vmatpush.msra.mxu0 0.0
  %230 = vmatpush.msra.mxu0 0.0
  %231 = vmatpush.msra.mxu0 0.0
  %232 = vmatpush.msra.mxu0 0.0
  %233 = vmatpush.msra.mxu0 0.0
  %234 = vmatpush.msra.mxu0 0.0
  %235 = vmatpush.msra.mxu0 0.0
  %236 = vmatpush.msra.mxu0 0.0
  %237 = vmatpush.msra.mxu0 0.0
  %238 = vmatpush.msra.mxu0 0.0
  %239 = vmatpush.msra.mxu0 %v72
  %240 = vmatpush.msra.mxu0 %v69
  %241 = vmatmul.f32.gmra.mxu0 %v220
  %v242 = vpop.f32.mrf.mxu0
  %v243 = vadd.f32 0.0, %v242
  %244 = vmatmul.f32.gmra.mxu0 %v223
  %v245 = vpop.f32.mrf.mxu0
  %v246 = vadd.f32 0.0, %v245
  %247 = vdwg.mxu0
  %248 = vset.pattern.permute.xlu0 1
  %249 = vperm.xlu0 %248, %v138
  %v250 = vpop.permute.xlu0 %249
  %252 = vset.pattern.permute.xlu0 1
  %253 = vperm.xlu0 %252, %v141
  %v254 = vpop.permute.xlu0 %253
  %v256 = vperm.slane %v159, 1
  %v257 = vadd.f32 %v250, %v256
  %v258 = vadd.f32 %v254, %v256
  %vm259 = vcmp.gt.f32.partialorder %v257, 0.0
  %vm260 = vcmp.gt.f32.partialorder %v258, 0.0
  %v261 = vmul.f32 %v257, 0.2
  %v262 = vmul.f32 %v258, 0.2
  %v263 = vsel %vm259, %v257, %v261
  %v264 = vsel %vm260, %v258, %v262
  %v265 = vadd.f32 %v263, %v41
  %v266 = vadd.f32 %v264, %v42
  %v267 = vsel %vm196, %v265, -inf
  %268 = vmax.xlane.f32.xlu0 %v267
  %v269 = vpop.xlane.xlu0 %268
  %v270 = vsel %vm196, %v266, -inf
  %271 = vmax.xlane.f32.xlu0 %v270
  %v272 = vpop.xlane.xlu0 %271
  %v273 = vsub.f32 %v265, %v269
  %v274 = vsub.f32 %v266, %v272
  %v275 = vmul.f32 %v273, 1.442695
  %v276 = vpow.pop %v275
  %v277 = vmul.f32 %v274, 1.442695
  %v278 = vpow.pop %v277
  %v279 = vsel %vm196, %v276, 0.0
  %280 = vadd.xlane.f32.xlu0 %v279
  %v281 = vpop.xlane.xlu0 %280
  %v282 = vsel %vm196, %v278, 0.0
  %283 = vadd.xlane.f32.xlu0 %v282
  %v284 = vpop.xlane.xlu0 %283
  %v285 = vrcp.pop %v281
  %v286 = vrcp.pop %v284
  %v287 = vmul.f32 %v276, %v285
  %v288 = vmul.f32 %v278, %v286
  %289 = vrot.lane.b32.xlu0 %v69, 112
  %v290 = vpop.permute.xlu0 %289
  %291 = vrot.lane.b32.xlu0 %v72, 112
  %v292 = vpop.permute.xlu0 %291
  %v296 = vsel %vm196, %v287, 0
  %v299 = vsel %vm196, %v288, 0
  %301 = vmatpush.msra.mxu0 0.0
  %302 = vmatpush.msra.mxu0 0.0
  %303 = vmatpush.msra.mxu0 0.0
  %304 = vmatpush.msra.mxu0 0.0
  %305 = vmatpush.msra.mxu0 0.0
  %306 = vmatpush.msra.mxu0 0.0
  %307 = vmatpush.msra.mxu0 0.0
  %308 = vmatpush.msra.mxu0 0.0
  %309 = vmatpush.msra.mxu0 0.0
  %310 = vmatpush.msra.mxu0 0.0
  %311 = vmatpush.msra.mxu0 0.0
  %312 = vmatpush.msra.mxu0 0.0
  %313 = vmatpush.msra.mxu0 0.0
  %314 = vmatpush.msra.mxu0 0.0
  %315 = vmatpush.msra.mxu0 %v292
  %316 = vmatpush.msra.mxu0 %v290
  %317 = vmatmul.f32.gmra.mxu0 %v296
  %v318 = vpop.f32.mrf.mxu0
  %v319 = vadd.f32 0.0, %v318
  %320 = vmatmul.f32.gmra.mxu0 %v299
  %v321 = vpop.f32.mrf.mxu0
  %v322 = vadd.f32 0.0, %v321
  %323 = vdwg.mxu0
  %324 = vset.pattern.permute.xlu0 2
  %325 = vperm.xlu0 %324, %v138
  %v326 = vpop.permute.xlu0 %325
  %328 = vset.pattern.permute.xlu0 2
  %329 = vperm.xlu0 %328, %v141
  %v330 = vpop.permute.xlu0 %329
  %v332 = vperm.slane %v159, 2
  %v333 = vadd.f32 %v326, %v332
  %v334 = vadd.f32 %v330, %v332
  %vm335 = vcmp.gt.f32.partialorder %v333, 0.0
  %vm336 = vcmp.gt.f32.partialorder %v334, 0.0
  %v337 = vmul.f32 %v333, 0.2
  %v338 = vmul.f32 %v334, 0.2
  %v339 = vsel %vm335, %v333, %v337
  %v340 = vsel %vm336, %v334, %v338
  %v341 = vadd.f32 %v339, %v41
  %v342 = vadd.f32 %v340, %v42
  %v343 = vsel %vm196, %v341, -inf
  %344 = vmax.xlane.f32.xlu0 %v343
  %v345 = vpop.xlane.xlu0 %344
  %v346 = vsel %vm196, %v342, -inf
  %347 = vmax.xlane.f32.xlu0 %v346
  %v348 = vpop.xlane.xlu0 %347
  %v349 = vsub.f32 %v341, %v345
  %v350 = vsub.f32 %v342, %v348
  %v351 = vmul.f32 %v349, 1.442695
  %v352 = vpow.pop %v351
  %v353 = vmul.f32 %v350, 1.442695
  %v354 = vpow.pop %v353
  %v355 = vsel %vm196, %v352, 0.0
  %356 = vadd.xlane.f32.xlu0 %v355
  %v357 = vpop.xlane.xlu0 %356
  %v358 = vsel %vm196, %v354, 0.0
  %359 = vadd.xlane.f32.xlu0 %v358
  %v360 = vpop.xlane.xlu0 %359
  %v361 = vrcp.pop %v357
  %v362 = vrcp.pop %v360
  %v363 = vmul.f32 %v352, %v361
  %v364 = vmul.f32 %v354, %v362
  %365 = vrot.lane.b32.xlu0 %v69, 96
  %v366 = vpop.permute.xlu0 %365
  %367 = vrot.lane.b32.xlu0 %v72, 96
  %v368 = vpop.permute.xlu0 %367
  %v372 = vsel %vm196, %v363, 0
  %v375 = vsel %vm196, %v364, 0
  %377 = vmatpush.msra.mxu0 0.0
  %378 = vmatpush.msra.mxu0 0.0
  %379 = vmatpush.msra.mxu0 0.0
  %380 = vmatpush.msra.mxu0 0.0
  %381 = vmatpush.msra.mxu0 0.0
  %382 = vmatpush.msra.mxu0 0.0
  %383 = vmatpush.msra.mxu0 0.0
  %384 = vmatpush.msra.mxu0 0.0
  %385 = vmatpush.msra.mxu0 0.0
  %386 = vmatpush.msra.mxu0 0.0
  %387 = vmatpush.msra.mxu0 0.0
  %388 = vmatpush.msra.mxu0 0.0
  %389 = vmatpush.msra.mxu0 0.0
  %390 = vmatpush.msra.mxu0 0.0
  %391 = vmatpush.msra.mxu0 %v368
  %392 = vmatpush.msra.mxu0 %v366
  %393 = vmatmul.f32.gmra.mxu0 %v372
  %v394 = vpop.f32.mrf.mxu0
  %v395 = vadd.f32 0.0, %v394
  %396 = vmatmul.f32.gmra.mxu0 %v375
  %v397 = vpop.f32.mrf.mxu0
  %v398 = vadd.f32 0.0, %v397
  %399 = vdwg.mxu0
  %400 = vset.pattern.permute.xlu0 3
  %401 = vperm.xlu0 %400, %v138
  %v402 = vpop.permute.xlu0 %401
  %404 = vset.pattern.permute.xlu0 3
  %405 = vperm.xlu0 %404, %v141
  %v406 = vpop.permute.xlu0 %405
  %v408 = vperm.slane %v159, 3
  %v409 = vadd.f32 %v402, %v408
  %v410 = vadd.f32 %v406, %v408
  %vm411 = vcmp.gt.f32.partialorder %v409, 0.0
  %vm412 = vcmp.gt.f32.partialorder %v410, 0.0
  %v413 = vmul.f32 %v409, 0.2
  %v414 = vmul.f32 %v410, 0.2
  %v415 = vsel %vm411, %v409, %v413
  %v416 = vsel %vm412, %v410, %v414
  %v417 = vadd.f32 %v415, %v41
  %v418 = vadd.f32 %v416, %v42
  %v419 = vsel %vm196, %v417, -inf
  %420 = vmax.xlane.f32.xlu0 %v419
  %v421 = vpop.xlane.xlu0 %420
  %v422 = vsel %vm196, %v418, -inf
  %423 = vmax.xlane.f32.xlu0 %v422
  %v424 = vpop.xlane.xlu0 %423
  %v425 = vsub.f32 %v417, %v421
  %v426 = vsub.f32 %v418, %v424
  %v427 = vmul.f32 %v425, 1.442695
  %v428 = vpow.pop %v427
  %v429 = vmul.f32 %v426, 1.442695
  %v430 = vpow.pop %v429
  %v431 = vsel %vm196, %v428, 0.0
  %432 = vadd.xlane.f32.xlu0 %v431
  %v433 = vpop.xlane.xlu0 %432
  %v434 = vsel %vm196, %v430, 0.0
  %435 = vadd.xlane.f32.xlu0 %v434
  %v436 = vpop.xlane.xlu0 %435
  %v437 = vrcp.pop %v433
  %v438 = vrcp.pop %v436
  %v439 = vmul.f32 %v428, %v437
  %v440 = vmul.f32 %v430, %v438
  %441 = vrot.lane.b32.xlu0 %v69, 80
  %v442 = vpop.permute.xlu0 %441
  %443 = vrot.lane.b32.xlu0 %v72, 80
  %v444 = vpop.permute.xlu0 %443
  %v448 = vsel %vm196, %v439, 0
  %v451 = vsel %vm196, %v440, 0
  %453 = vmatpush.msra.mxu0 0.0
  %454 = vmatpush.msra.mxu0 0.0
  %455 = vmatpush.msra.mxu0 0.0
  %456 = vmatpush.msra.mxu0 0.0
  %457 = vmatpush.msra.mxu0 0.0
  %458 = vmatpush.msra.mxu0 0.0
  %459 = vmatpush.msra.mxu0 0.0
  %460 = vmatpush.msra.mxu0 0.0
  %461 = vmatpush.msra.mxu0 0.0
  %462 = vmatpush.msra.mxu0 0.0
  %463 = vmatpush.msra.mxu0 0.0
  %464 = vmatpush.msra.mxu0 0.0
  %465 = vmatpush.msra.mxu0 0.0
  %466 = vmatpush.msra.mxu0 0.0
  %467 = vmatpush.msra.mxu0 %v444
  %468 = vmatpush.msra.mxu0 %v442
  %469 = vmatmul.f32.gmra.mxu0 %v448
  %v470 = vpop.f32.mrf.mxu0
  %v471 = vadd.f32 0.0, %v470
  %472 = vmatmul.f32.gmra.mxu0 %v451
  %v473 = vpop.f32.mrf.mxu0
  %v474 = vadd.f32 0.0, %v473
  %475 = vdwg.mxu0
  %478 = vrot.lane.b32.xlu0 %v319, 16
  %v479 = vpop.permute.xlu0 %478
  %480 = vrot.lane.b32.xlu0 %v322, 16
  %v481 = vpop.permute.xlu0 %480
  %486 = vrot.lane.b32.xlu0 %v395, 32
  %v487 = vpop.permute.xlu0 %486
  %488 = vrot.lane.b32.xlu0 %v398, 32
  %v489 = vpop.permute.xlu0 %488
  %494 = vrot.lane.b32.xlu0 %v471, 48
  %v495 = vpop.permute.xlu0 %494
  %496 = vrot.lane.b32.xlu0 %v474, 48
  %v497 = vpop.permute.xlu0 %496
  %v500 = vsel %vm196, %v243, %v479
  %v501 = vsel %vm196, %v246, %v481
  %vm502 = vcmask 261120
  %v503 = vsel %vm502, %v500, %v487
  %v504 = vsel %vm502, %v501, %v489
  %vm505 = vcmask 392192
  %v506 = vsel %vm505, %v503, %v495
  %v507 = vsel %vm505, %v504, %v497
  %v508 = vld [vmem:[%s5] sm:$0x1]
  %v510 = vperm.slane %v508, 0
  %v512 = vadd.f32 %v506, %v510
  %v513 = vadd.f32 %v507, %v510
  %v514 = vmax.f32 %v512, 0.0
  %v515 = vmax.f32 %v513, 0.0
  %v516 = vld [vmem:[%s6] sm:$0xff]
  %v517 = vld [vmem:[%s6 + $0x8] sm:$0xff]
  %v518 = vld [vmem:[%s6 + $0x10] sm:$0xff]
  %v519 = vld [vmem:[%s6 + $0x18] sm:$0xff]
  %v520 = vld [vmem:[%s6 + $0x20] sm:$0xff]
  %v521 = vld [vmem:[%s6 + $0x28] sm:$0xff]
  %v522 = vld [vmem:[%s6 + $0x30] sm:$0xff]
  %v523 = vld [vmem:[%s6 + $0x38] sm:$0xff]
  %v525 = vsel %vm90, %v514, 0
  %v528 = vsel %vm90, %v515, 0
  %530 = vmatpush.msra.mxu0 0.0
  %531 = vmatpush.msra.mxu0 0.0
  %532 = vmatpush.msra.mxu0 0.0
  %533 = vmatpush.msra.mxu0 0.0
  %534 = vmatpush.msra.mxu0 0.0
  %535 = vmatpush.msra.mxu0 0.0
  %536 = vmatpush.msra.mxu0 0.0
  %537 = vmatpush.msra.mxu0 0.0
  %538 = vmatpush.msra.mxu0 %v523
  %539 = vmatpush.msra.mxu0 %v522
  %540 = vmatpush.msra.mxu0 %v521
  %541 = vmatpush.msra.mxu0 %v520
  %542 = vmatpush.msra.mxu0 %v519
  %543 = vmatpush.msra.mxu0 %v518
  %544 = vmatpush.msra.mxu0 %v517
  %545 = vmatpush.msra.mxu0 %v516
  %546 = vmatmul.f32.gmra.mxu0 %v525
  %v547 = vpop.f32.mrf.mxu0
  %v548 = vadd.f32 0.0, %v547
  %549 = vmatmul.f32.gmra.mxu0 %v528
  %v550 = vpop.f32.mrf.mxu0
  %v551 = vadd.f32 0.0, %v550
  %552 = vdwg.mxu0
  %v553 = vld [vmem:[%s7] sm:$0xff]
  %v554 = vld [vmem:[%s7 + $0x8] sm:$0xff]
  %v555 = vld [vmem:[%s7 + $0x10] sm:$0xff]
  %v556 = vld [vmem:[%s7 + $0x18] sm:$0xff]
  %v557 = vld [vmem:[%s8] sm:$0xff]
  %v558 = vld [vmem:[%s8 + $0x8] sm:$0xff]
  %v559 = vld [vmem:[%s8 + $0x10] sm:$0xff]
  %v560 = vld [vmem:[%s8 + $0x18] sm:$0xff]
  %v562 = vsel %vm502, %v548, 0
  %v565 = vsel %vm502, %v551, 0
  %567 = vmatpush.msra.mxu0 0.0
  %568 = vmatpush.msra.mxu0 0.0
  %569 = vmatpush.msra.mxu0 0.0
  %570 = vmatpush.msra.mxu0 0.0
  %571 = vmatpush.msra.mxu0 0.0
  %572 = vmatpush.msra.mxu0 0.0
  %573 = vmatpush.msra.mxu0 0.0
  %574 = vmatpush.msra.mxu0 0.0
  %575 = vmatpush.msra.mxu0 0.0
  %576 = vmatpush.msra.mxu0 0.0
  %577 = vmatpush.msra.mxu0 0.0
  %578 = vmatpush.msra.mxu0 0.0
  %579 = vmatpush.msra.mxu0 %v556
  %580 = vmatpush.msra.mxu0 %v555
  %581 = vmatpush.msra.mxu0 %v554
  %582 = vmatpush.msra.mxu0 %v553
  %583 = vmatmul.f32.gmra.mxu0 %v562
  %v584 = vpop.f32.mrf.mxu0
  %v585 = vadd.f32 0.0, %v584
  %586 = vmatmul.f32.gmra.mxu0 %v565
  %v587 = vpop.f32.mrf.mxu0
  %v588 = vadd.f32 0.0, %v587
  %589 = vdwg.mxu0
  %590 = vmatpush.msra.mxu0 0.0
  %591 = vmatpush.msra.mxu0 0.0
  %592 = vmatpush.msra.mxu0 0.0
  %593 = vmatpush.msra.mxu0 0.0
  %594 = vmatpush.msra.mxu0 0.0
  %595 = vmatpush.msra.mxu0 0.0
  %596 = vmatpush.msra.mxu0 0.0
  %597 = vmatpush.msra.mxu0 0.0
  %598 = vmatpush.msra.mxu0 0.0
  %599 = vmatpush.msra.mxu0 0.0
  %600 = vmatpush.msra.mxu0 0.0
  %601 = vmatpush.msra.mxu0 0.0
  %602 = vmatpush.msra.mxu0 %v560
  %603 = vmatpush.msra.mxu0 %v559
  %604 = vmatpush.msra.mxu0 %v558
  %605 = vmatpush.msra.mxu0 %v557
  %606 = vmatmul.f32.gmra.mxu0 %v562
  %v607 = vpop.f32.mrf.mxu0
  %v608 = vadd.f32 0.0, %v607
  %609 = vmatmul.f32.gmra.mxu0 %v565
  %v610 = vpop.f32.mrf.mxu0
  %v611 = vadd.f32 0.0, %v610
  %612 = vdwg.mxu0
  %613 = vxpose.xlu0.b32.start [1/16] %v585, 128
  %614 = vxpose.xlu0.b32.cont [2/16] %v588, 128
  %615 = vxpose.xlu0.b32.cont [3/16] 0.0, 128
  %616 = vxpose.xlu0.b32.cont [4/16] 0.0, 128
  %617 = vxpose.xlu0.b32.cont [5/16] 0.0, 128
  %618 = vxpose.xlu0.b32.cont [6/16] 0.0, 128
  %619 = vxpose.xlu0.b32.cont [7/16] 0.0, 128
  %620 = vxpose.xlu0.b32.cont [8/16] 0.0, 128
  %621 = vxpose.xlu0.b32.cont [9/16] 0.0, 128
  %622 = vxpose.xlu0.b32.cont [10/16] 0.0, 128
  %623 = vxpose.xlu0.b32.cont [11/16] 0.0, 128
  %624 = vxpose.xlu0.b32.cont [12/16] 0.0, 128
  %625 = vxpose.xlu0.b32.cont [13/16] 0.0, 128
  %626 = vxpose.xlu0.b32.cont [14/16] 0.0, 128
  %627 = vxpose.xlu0.b32.cont [15/16] 0.0, 128
  %628 = vxpose.xlu0.b32.end [16/16] 0.0, 128
  %v629 = vpop.trf.xlu0
  %v630 = vpop.trf.xlu0
  %v631 = vpop.trf.xlu0
  %v632 = vpop.trf.xlu0
  %v633 = vpop.trf.xlu0
  %v634 = vpop.trf.xlu0
  %v635 = vpop.trf.xlu0
  %v636 = vpop.trf.xlu0
  %v637 = vpop.trf.xlu0
  %v638 = vpop.trf.xlu0
  %v639 = vpop.trf.xlu0
  %v640 = vpop.trf.xlu0
  %v641 = vpop.trf.xlu0
  %v642 = vpop.trf.xlu0
  %v643 = vpop.trf.xlu0
  %v644 = vpop.trf.xlu0
  %646 = vset.pattern.permute.xlu0 0
  %647 = vperm.xlu0 %646, %v608
  %v648 = vpop.permute.xlu0 %647
  %651 = vset.pattern.permute.xlu0 0
  %652 = vperm.xlu0 %651, %v611
  %v653 = vpop.permute.xlu0 %652
  %v655 = vperm.slane %v629, 0
  %v656 = vadd.f32 %v648, %v655
  %v657 = vadd.f32 %v653, %v655
  %vm658 = vcmp.gt.f32.partialorder %v656, 0.0
  %vm659 = vcmp.gt.f32.partialorder %v657, 0.0
  %v660 = vmul.f32 %v656, 0.2
  %v661 = vmul.f32 %v657, 0.2
  %v662 = vsel %vm658, %v656, %v660
  %v663 = vsel %vm659, %v657, %v661
  %v664 = vadd.f32 %v662, %v41
  %v665 = vadd.f32 %v663, %v42
  %v666 = vsel %vm196, %v664, -inf
  %667 = vmax.xlane.f32.xlu0 %v666
  %v668 = vpop.xlane.xlu0 %667
  %v669 = vsel %vm196, %v665, -inf
  %670 = vmax.xlane.f32.xlu0 %v669
  %v671 = vpop.xlane.xlu0 %670
  %v672 = vsub.f32 %v664, %v668
  %v673 = vsub.f32 %v665, %v671
  %v674 = vmul.f32 %v672, 1.442695
  %v675 = vpow.pop %v674
  %v676 = vmul.f32 %v673, 1.442695
  %v677 = vpow.pop %v676
  %v678 = vsel %vm196, %v675, 0.0
  %679 = vadd.xlane.f32.xlu0 %v678
  %v680 = vpop.xlane.xlu0 %679
  %v681 = vsel %vm196, %v677, 0.0
  %682 = vadd.xlane.f32.xlu0 %v681
  %v683 = vpop.xlane.xlu0 %682
  %v684 = vrcp.pop %v680
  %v685 = vrcp.pop %v683
  %v686 = vmul.f32 %v675, %v684
  %v687 = vmul.f32 %v677, %v685
  %688 = vset.pattern.permute.xlu0 1
  %689 = vperm.xlu0 %688, %v608
  %v690 = vpop.permute.xlu0 %689
  %692 = vset.pattern.permute.xlu0 1
  %693 = vperm.xlu0 %692, %v611
  %v694 = vpop.permute.xlu0 %693
  %v696 = vperm.slane %v629, 1
  %v697 = vadd.f32 %v690, %v696
  %v698 = vadd.f32 %v694, %v696
  %vm699 = vcmp.gt.f32.partialorder %v697, 0.0
  %vm700 = vcmp.gt.f32.partialorder %v698, 0.0
  %v701 = vmul.f32 %v697, 0.2
  %v702 = vmul.f32 %v698, 0.2
  %v703 = vsel %vm699, %v697, %v701
  %v704 = vsel %vm700, %v698, %v702
  %v705 = vadd.f32 %v703, %v41
  %v706 = vadd.f32 %v704, %v42
  %v707 = vsel %vm196, %v705, -inf
  %708 = vmax.xlane.f32.xlu0 %v707
  %v709 = vpop.xlane.xlu0 %708
  %v710 = vsel %vm196, %v706, -inf
  %711 = vmax.xlane.f32.xlu0 %v710
  %v712 = vpop.xlane.xlu0 %711
  %v713 = vsub.f32 %v705, %v709
  %v714 = vsub.f32 %v706, %v712
  %v715 = vmul.f32 %v713, 1.442695
  %v716 = vpow.pop %v715
  %v717 = vmul.f32 %v714, 1.442695
  %v718 = vpow.pop %v717
  %v719 = vsel %vm196, %v716, 0.0
  %720 = vadd.xlane.f32.xlu0 %v719
  %v721 = vpop.xlane.xlu0 %720
  %v722 = vsel %vm196, %v718, 0.0
  %723 = vadd.xlane.f32.xlu0 %v722
  %v724 = vpop.xlane.xlu0 %723
  %v725 = vrcp.pop %v721
  %v726 = vrcp.pop %v724
  %v727 = vmul.f32 %v716, %v725
  %v728 = vmul.f32 %v718, %v726
  %729 = vrot.lane.b32.xlu0 %v548, 120
  %v730 = vpop.permute.xlu0 %729
  %731 = vrot.lane.b32.xlu0 %v551, 120
  %v732 = vpop.permute.xlu0 %731
  %v736 = vsel %vm196, %v727, 0
  %v739 = vsel %vm196, %v728, 0
  %741 = vmatpush.msra.mxu0 0.0
  %742 = vmatpush.msra.mxu0 0.0
  %743 = vmatpush.msra.mxu0 0.0
  %744 = vmatpush.msra.mxu0 0.0
  %745 = vmatpush.msra.mxu0 0.0
  %746 = vmatpush.msra.mxu0 0.0
  %747 = vmatpush.msra.mxu0 0.0
  %748 = vmatpush.msra.mxu0 0.0
  %749 = vmatpush.msra.mxu0 0.0
  %750 = vmatpush.msra.mxu0 0.0
  %751 = vmatpush.msra.mxu0 0.0
  %752 = vmatpush.msra.mxu0 0.0
  %753 = vmatpush.msra.mxu0 0.0
  %754 = vmatpush.msra.mxu0 0.0
  %755 = vmatpush.msra.mxu0 %v732
  %756 = vmatpush.msra.mxu0 %v730
  %757 = vmatmul.f32.gmra.mxu0 %v736
  %v758 = vpop.f32.mrf.mxu0
  %v759 = vadd.f32 0.0, %v758
  %760 = vmatmul.f32.gmra.mxu0 %v739
  %v761 = vpop.f32.mrf.mxu0
  %v762 = vadd.f32 0.0, %v761
  %763 = vdwg.mxu0
  %764 = vset.pattern.permute.xlu0 2
  %765 = vperm.xlu0 %764, %v608
  %v766 = vpop.permute.xlu0 %765
  %768 = vset.pattern.permute.xlu0 2
  %769 = vperm.xlu0 %768, %v611
  %v770 = vpop.permute.xlu0 %769
  %v772 = vperm.slane %v629, 2
  %v773 = vadd.f32 %v766, %v772
  %v774 = vadd.f32 %v770, %v772
  %vm775 = vcmp.gt.f32.partialorder %v773, 0.0
  %vm776 = vcmp.gt.f32.partialorder %v774, 0.0
  %v777 = vmul.f32 %v773, 0.2
  %v778 = vmul.f32 %v774, 0.2
  %v779 = vsel %vm775, %v773, %v777
  %v780 = vsel %vm776, %v774, %v778
  %v781 = vadd.f32 %v779, %v41
  %v782 = vadd.f32 %v780, %v42
  %v783 = vsel %vm196, %v781, -inf
  %784 = vmax.xlane.f32.xlu0 %v783
  %v785 = vpop.xlane.xlu0 %784
  %v786 = vsel %vm196, %v782, -inf
  %787 = vmax.xlane.f32.xlu0 %v786
  %v788 = vpop.xlane.xlu0 %787
  %v789 = vsub.f32 %v781, %v785
  %v790 = vsub.f32 %v782, %v788
  %v791 = vmul.f32 %v789, 1.442695
  %v792 = vpow.pop %v791
  %v793 = vmul.f32 %v790, 1.442695
  %v794 = vpow.pop %v793
  %v795 = vsel %vm196, %v792, 0.0
  %796 = vadd.xlane.f32.xlu0 %v795
  %v797 = vpop.xlane.xlu0 %796
  %v798 = vsel %vm196, %v794, 0.0
  %799 = vadd.xlane.f32.xlu0 %v798
  %v800 = vpop.xlane.xlu0 %799
  %v801 = vrcp.pop %v797
  %v802 = vrcp.pop %v800
  %v803 = vmul.f32 %v792, %v801
  %v804 = vmul.f32 %v794, %v802
  %805 = vrot.lane.b32.xlu0 %v548, 112
  %v806 = vpop.permute.xlu0 %805
  %807 = vrot.lane.b32.xlu0 %v551, 112
  %v808 = vpop.permute.xlu0 %807
  %v812 = vsel %vm196, %v803, 0
  %v815 = vsel %vm196, %v804, 0
  %817 = vmatpush.msra.mxu0 0.0
  %818 = vmatpush.msra.mxu0 0.0
  %819 = vmatpush.msra.mxu0 0.0
  %820 = vmatpush.msra.mxu0 0.0
  %821 = vmatpush.msra.mxu0 0.0
  %822 = vmatpush.msra.mxu0 0.0
  %823 = vmatpush.msra.mxu0 0.0
  %824 = vmatpush.msra.mxu0 0.0
  %825 = vmatpush.msra.mxu0 0.0
  %826 = vmatpush.msra.mxu0 0.0
  %827 = vmatpush.msra.mxu0 0.0
  %828 = vmatpush.msra.mxu0 0.0
  %829 = vmatpush.msra.mxu0 0.0
  %830 = vmatpush.msra.mxu0 0.0
  %831 = vmatpush.msra.mxu0 %v808
  %832 = vmatpush.msra.mxu0 %v806
  %833 = vmatmul.f32.gmra.mxu0 %v812
  %v834 = vpop.f32.mrf.mxu0
  %v835 = vadd.f32 0.0, %v834
  %836 = vmatmul.f32.gmra.mxu0 %v815
  %v837 = vpop.f32.mrf.mxu0
  %v838 = vadd.f32 0.0, %v837
  %839 = vdwg.mxu0
  %840 = vset.pattern.permute.xlu0 3
  %841 = vperm.xlu0 %840, %v608
  %v842 = vpop.permute.xlu0 %841
  %844 = vset.pattern.permute.xlu0 3
  %845 = vperm.xlu0 %844, %v611
  %v846 = vpop.permute.xlu0 %845
  %v848 = vperm.slane %v629, 3
  %v849 = vadd.f32 %v842, %v848
  %v850 = vadd.f32 %v846, %v848
  %vm851 = vcmp.gt.f32.partialorder %v849, 0.0
  %vm852 = vcmp.gt.f32.partialorder %v850, 0.0
  %v853 = vmul.f32 %v849, 0.2
  %v854 = vmul.f32 %v850, 0.2
  %v855 = vsel %vm851, %v849, %v853
  %v856 = vsel %vm852, %v850, %v854
  %v857 = vadd.f32 %v855, %v41
  %v858 = vadd.f32 %v856, %v42
  %v859 = vsel %vm196, %v857, -inf
  %860 = vmax.xlane.f32.xlu0 %v859
  %v861 = vpop.xlane.xlu0 %860
  %v862 = vsel %vm196, %v858, -inf
  %863 = vmax.xlane.f32.xlu0 %v862
  %v864 = vpop.xlane.xlu0 %863
  %v865 = vsub.f32 %v857, %v861
  %v866 = vsub.f32 %v858, %v864
  %v867 = vmul.f32 %v865, 1.442695
  %v868 = vpow.pop %v867
  %v869 = vmul.f32 %v866, 1.442695
  %v870 = vpow.pop %v869
  %v871 = vsel %vm196, %v868, 0.0
  %872 = vadd.xlane.f32.xlu0 %v871
  %v873 = vpop.xlane.xlu0 %872
  %v874 = vsel %vm196, %v870, 0.0
  %875 = vadd.xlane.f32.xlu0 %v874
  %v876 = vpop.xlane.xlu0 %875
  %v877 = vrcp.pop %v873
  %v878 = vrcp.pop %v876
  %v879 = vmul.f32 %v868, %v877
  %v880 = vmul.f32 %v870, %v878
  %881 = vrot.lane.b32.xlu0 %v548, 104
  %v882 = vpop.permute.xlu0 %881
  %883 = vrot.lane.b32.xlu0 %v551, 104
  %v884 = vpop.permute.xlu0 %883
  %v888 = vsel %vm196, %v879, 0
  %v891 = vsel %vm196, %v880, 0
  %893 = vmatpush.msra.mxu0 0.0
  %894 = vmatpush.msra.mxu0 0.0
  %895 = vmatpush.msra.mxu0 0.0
  %896 = vmatpush.msra.mxu0 0.0
  %897 = vmatpush.msra.mxu0 0.0
  %898 = vmatpush.msra.mxu0 0.0
  %899 = vmatpush.msra.mxu0 0.0
  %900 = vmatpush.msra.mxu0 0.0
  %901 = vmatpush.msra.mxu0 0.0
  %902 = vmatpush.msra.mxu0 0.0
  %903 = vmatpush.msra.mxu0 0.0
  %904 = vmatpush.msra.mxu0 0.0
  %905 = vmatpush.msra.mxu0 0.0
  %906 = vmatpush.msra.mxu0 0.0
  %907 = vmatpush.msra.mxu0 %v884
  %908 = vmatpush.msra.mxu0 %v882
  %909 = vmatmul.f32.gmra.mxu0 %v888
  %v910 = vpop.f32.mrf.mxu0
  %v911 = vadd.f32 0.0, %v910
  %912 = vmatmul.f32.gmra.mxu0 %v891
  %v913 = vpop.f32.mrf.mxu0
  %v914 = vadd.f32 0.0, %v913
  %915 = vdwg.mxu0
  %v917 = vsel %vm196, %v686, 0
  %v920 = vsel %vm196, %v687, 0
  %922 = vmatpush.msra.mxu0 0.0
  %923 = vmatpush.msra.mxu0 0.0
  %924 = vmatpush.msra.mxu0 0.0
  %925 = vmatpush.msra.mxu0 0.0
  %926 = vmatpush.msra.mxu0 0.0
  %927 = vmatpush.msra.mxu0 0.0
  %928 = vmatpush.msra.mxu0 0.0
  %929 = vmatpush.msra.mxu0 0.0
  %930 = vmatpush.msra.mxu0 0.0
  %931 = vmatpush.msra.mxu0 0.0
  %932 = vmatpush.msra.mxu0 0.0
  %933 = vmatpush.msra.mxu0 0.0
  %934 = vmatpush.msra.mxu0 0.0
  %935 = vmatpush.msra.mxu0 0.0
  %936 = vmatpush.msra.mxu0 %v551
  %937 = vmatpush.msra.mxu0 %v548
  %938 = vmatmul.f32.gmra.mxu0 %v917
  %v939 = vpop.f32.mrf.mxu0
  %v940 = vadd.f32 %v759, %v939
  %941 = vmatmul.f32.gmra.mxu0 %v920
  %v942 = vpop.f32.mrf.mxu0
  %v943 = vadd.f32 %v762, %v942
  %944 = vdwg.mxu0
  %v945 = vadd.f32 %v940, %v835
  %v946 = vadd.f32 %v943, %v838
  %v947 = vadd.f32 %v945, %v911
  %v948 = vadd.f32 %v946, %v914
  %v949 = vmul.f32 %v947, 0.25
  %v950 = vmul.f32 %v948, 0.25
  %v951 = vld [vmem:[%s9] sm:$0x1]
  %v953 = vperm.slane %v951, 0
  %v955 = vadd.f32 %v949, %v953
  %v956 = vadd.f32 %v950, %v953
  %957 = vst.msk [vmem:[%s10] sm:$0xff] %vm44, %v955
  %958 = vst.msk [vmem:[%s10 + $0x8] sm:$0xff] %vm44, %v956
  // Predicated region
  $region42: #{tpu_custom_call.1} parent=0 // pred_check
    _
  $region43: #{tpu_custom_call.1} parent=0 // pred_check_branch
    %960 = sbr.rel (0) target = $region45
  $region44: #{tpu_custom_call.1} parent=0 // pred_region
    _
  $region45: #{tpu_custom_call.1} parent=0 // pred_fallthru
    _
  // Predicated region
  $region46: #{tpu_custom_call.1} parent=0 // pred_check
    _
  $region47: #{tpu_custom_call.1} parent=0 // pred_check_branch
    %962 = sbr.rel (0) target = $region49
  $region48: #{tpu_custom_call.1} parent=0 // pred_region
    _
  $region49: #{tpu_custom_call.1} parent=0 // pred_fallthru
    _

</llo_original>
